<compile_context>
chip_gen: v7x
topology: tpu7x:2x2x1
jax: 0.10.0
libtpu: 0.0.40
codegen_flags: <defaults>
</compile_context>

<pallas_src>
import jax
import jax.numpy as jnp
import numpy as np
from jax.experimental import pallas as pl
from jax.experimental.pallas import tpu as pltpu


def _round_up(x, m):
    return ((x + m - 1) // m) * m


def _make_coral_kernel(td, g, ns, nt):
    inv_s = 1.0 / float(np.sqrt(ns - 1))
    inv_t = 1.0 / float(np.sqrt(nt - 1))

    def kernel(ii_ref, jj_ref, ww_ref, s_ref, t_ref, o_ref, zx_ref, zy_ref):
        q = pl.program_id(1)
        step = pl.program_id(0) * pl.num_programs(1) + q

        # Once per p-slice (correct on both single-core and megacore parts):
        # zero the resident accumulator and build the centered+scaled stacked
        # operands in VMEM scratch:
        #   zx[b] = [ Sc*a ;  Tc*b ]   (column tile b)
        #   zy[b] = [ Sc*a ; -Tc*b ]
        # so that zx[i]^T zy[j] = (cov_s - cov_t)[tile i, tile j].
        @pl.when(q == 0)
        def _():
            o_ref[...] = jnp.zeros_like(o_ref)
            s = s_ref[...].astype(jnp.float32)
            t = t_ref[...].astype(jnp.float32)
            sc = (s - jnp.mean(s, axis=0, keepdims=True)) * inv_s
            tc = (t - jnp.mean(t, axis=0, keepdims=True)) * inv_t
            for b in range(g):
                cols = slice(b * td, (b + 1) * td)
                sb = sc[:, cols]
                tb = tc[:, cols]
                zx_ref[b, 0:ns, :] = sb
                zx_ref[b, ns:ns + nt, :] = tb
                zy_ref[b, 0:ns, :] = sb
                zy_ref[b, ns:ns + nt, :] = -tb

        i = ii_ref[step]
        j = jj_ref[step]
        w = ww_ref[step].astype(jnp.float32)   # 1 diag, 2 off-diag, 0 padding

        xi = zx_ref[i]                          # (ns+nt, td)
        yj = zy_ref[j]                          # (ns+nt, td)
        # Single fused MXU matmul, contracting over the stacked batch axis.
        diff = jax.lax.dot_general(
            xi, yj, (((0,), (0,)), ((), ())),
            preferred_element_type=jnp.float32)  # (td, td) tile of cov_s-cov_t

        # Tile-wise partial of ||diff||_F^2 into the resident (8, 128) output
        # block: static (8,128)-aligned slices + VPU adds only.
        acc = None
        for r in range(td // 8):
            blk = diff[r * 8:(r + 1) * 8, :]
            blk = blk * blk
            acc = blk if acc is None else acc + blk        # (8, td)
        part = acc[:, 0:128]
        for c in range(1, td // 128):
            part = part + acc[:, c * 128:(c + 1) * 128]    # (8, 128)
        o_ref[...] += w * part

    return kernel


def coral_loss(source_features, target_features, *, tile_d=256):
    """Deep CORAL loss. source: (Ns, d), target: (Nt, d). Returns scalar f32."""
    ns, d = source_features.shape
    nt, d_t = target_features.shape
    assert d == d_t, "source/target feature dims must match"
    assert ns >= 2 and nt >= 2, "CORAL needs >= 2 samples per domain (N-1 divisor)"

    # Covariance tile width: multiple of 128 lanes, at most tile_d.
    td = min(_round_up(tile_d, 128), _round_up(d, 128))
    dp = _round_up(d, td)
    if dp != d:
        pad = dp - d
        # Zero columns have zero mean -> contribute exactly 0 to both covs.
        source_features = jnp.pad(source_features, ((0, 0), (0, pad)))
        target_features = jnp.pad(target_features, ((0, 0), (0, pad)))
    g = dp // td

    # Upper-triangular covariance tiles (cov_s - cov_t is symmetric):
    # weight 1 on the diagonal, 2 off-diagonal, 0 for grid padding.
    pairs = [(i, j) for i in range(g) for j in range(i, g)]
    ntiles = len(pairs)
    num_p = 2 if ntiles >= 2 else 1          # leading "parallel" axis (megacore)
    steps_per_p = pl.cdiv(ntiles, num_p)
    total = num_p * steps_per_p
    ii = np.zeros((total,), np.int32)
    jj = np.zeros((total,), np.int32)
    ww = np.zeros((total,), np.int32)
    for k, (i, j) in enumerate(pairs):
        ii[k], jj[k], ww[k] = i, j, (1 if i == j else 2)

    kernel = _make_coral_kernel(td, g, ns, nt)

    itemsize = jnp.dtype(source_features.dtype).itemsize
    flops = 2 * (ns + nt) * td * td * total + 8 * (ns + nt) * dp
    bytes_accessed = (ns + nt) * dp * itemsize + total * 12 + num_p * 8 * 128 * 4

    # Rough VMEM budget: double-buffered full-width inputs + two stacked
    # scratch operands.  Only raise the scoped limit when actually needed.
    vmem_est = (2 * (ns + nt) * dp * itemsize
                + 2 * (ns + nt) * dp * 4
                + 4 * num_p * 8 * 128 * 4)
    compiler_kwargs = dict(dimension_semantics=("parallel", "arbitrary"))
    if vmem_est > 24 * 1024 * 1024:
        compiler_kwargs["vmem_limit_bytes"] = int(min(vmem_est * 1.5,
                                                      60 * 1024 * 1024))

    partials = pl.pallas_call(
        kernel,
        out_shape=jax.ShapeDtypeStruct((num_p * 8, 128), jnp.float32),
        grid_spec=pltpu.PrefetchScalarGridSpec(
            num_scalar_prefetch=3,
            grid=(num_p, steps_per_p),
            in_specs=[
                # Full feature matrices, VMEM-resident for the whole grid
                # (constant index_map => DMA'd only once per core).
                pl.BlockSpec((ns, dp), lambda p, q, it, jt, wt: (0, 0)),
                pl.BlockSpec((nt, dp), lambda p, q, it, jt, wt: (0, 0)),
            ],
            out_specs=pl.BlockSpec((8, 128), lambda p, q, it, jt, wt: (p, 0)),
            scratch_shapes=[
                pltpu.VMEM((g, ns + nt, td), jnp.float32),   # [Sc*a ;  Tc*b]
                pltpu.VMEM((g, ns + nt, td), jnp.float32),   # [Sc*a ; -Tc*b]
            ],
        ),
        compiler_params=pltpu.CompilerParams(**compiler_kwargs),
        cost_estimate=pl.CostEstimate(
            flops=int(flops),
            transcendentals=0,
            bytes_accessed=int(bytes_accessed),
        ),
    )(jnp.asarray(ii), jnp.asarray(jj), jnp.asarray(ww),
      source_features, target_features)

    frob = jnp.sqrt(jnp.sum(partials))
    return frob / (4.0 * d * d)


def _reference(source, target):
    """Pure-JAX reference mirroring the PyTorch CoralLoss.forward."""
    d = source.shape[1]
    source = source.astype(jnp.float32)
    target = target.astype(jnp.float32)
    sc = source - jnp.mean(source, axis=0, keepdims=True)
    tc = target - jnp.mean(target, axis=0, keepdims=True)
    cov_s = sc.T @ sc / (source.shape[0] - 1)
    cov_t = tc.T @ tc / (target.shape[0] - 1)
    return jnp.sqrt(jnp.sum((cov_s - cov_t) ** 2)) / (4.0 * d * d)


if __name__ == "__main__":
    key = jax.random.PRNGKey(0)
    k1, k2 = jax.random.split(key)

    # d=320 pads to 512 with 256-wide tiles -> g=2, three upper-triangular
    # covariance tiles split over a 2-wide "parallel" axis (one zero-weight
    # padding step); Ns != Nt exercises the distinct (N-1) scalings.
    NS, NT, D = 8, 16, 320
    source = jax.random.normal(k1, (NS, D), dtype=jnp.float32)
    target = jax.random.normal(k2, (NT, D), dtype=jnp.float32) * 1.5 + 0.3

    loss = coral_loss(source, target)
    jax.block_until_ready(loss)

    ref = _reference(source, target)
    assert jnp.allclose(loss, ref, rtol=1e-3, atol=1e-6), (loss, ref)

    print("KERNEL_OK")
</pallas_src>

<mosaic_0001>
module attributes {stable_mosaic.version = 11 : i64} {
  func.func @kernel(%arg0: i32, %arg1: i32, %arg2: memref<4xi32, #tpu.memory_space<smem>>, %arg3: memref<4xi32, #tpu.memory_space<smem>>, %arg4: memref<4xi32, #tpu.memory_space<smem>>, %arg5: memref<8x512xf32, #tpu.memory_space<vmem>>, %arg6: memref<16x512xf32, #tpu.memory_space<vmem>>, %arg7: memref<8x128xf32, #tpu.memory_space<vmem>>, %arg8: memref<2x24x256xf32, #tpu.memory_space<vmem>>, %arg9: memref<2x24x256xf32, #tpu.memory_space<vmem>>) attributes {dimension_semantics = [#tpu.dimension_semantics<parallel>, #tpu.dimension_semantics<arbitrary>], iteration_bounds = array<i64: 2, 2>, scalar_prefetch = 3 : i64, scratch_operands = 2 : i64, tpu.core_type = #tpu.core_type<tc>, window_params = [{pipeline_mode = #tpu.pipeline_mode<synchronous>, transform_indices = @transform_0, window_bounds = array<i64: 8, 512>}, {pipeline_mode = #tpu.pipeline_mode<synchronous>, transform_indices = @transform_1, window_bounds = array<i64: 16, 512>}, {transform_indices = @transform_2, window_bounds = array<i64: 8, 128>}]} {
    %c2_i32 = arith.constant 2 : i32
    %0 = arith.muli %arg0, %c2_i32 : i32
    %1 = arith.addi %0, %arg1 : i32
    %c0_i32 = arith.constant 0 : i32
    %2 = arith.cmpi eq, %arg1, %c0_i32 : i32
    %3 = arith.extui %2 : i1 to i32
    %c0_i32_0 = arith.constant 0 : i32
    %4 = arith.cmpi ne, %3, %c0_i32_0 : i32
    scf.if %4 {
      %cst_8 = arith.constant 0.000000e+00 : f32
      %122 = vector.broadcast %cst_8 : f32 to vector<8x128xf32>
      %c0_9 = arith.constant 0 : index
      %c0_10 = arith.constant 0 : index
      %123 = vector.load %arg7[%c0_9, %c0_10] : memref<8x128xf32, #tpu.memory_space<vmem>>, vector<8x128xf32>
      tpu.vector_store %arg7[%c0_9, %c0_10], %122 {strides = array<i32>} : memref<8x128xf32, #tpu.memory_space<vmem>>, vector<8x128xf32>,
      %c0_11 = arith.constant 0 : index
      %c0_12 = arith.constant 0 : index
      %124 = vector.load %arg5[%c0_11, %c0_12] : memref<8x512xf32, #tpu.memory_space<vmem>>, vector<8x512xf32>
      %c0_13 = arith.constant 0 : index
      %c0_14 = arith.constant 0 : index
      %125 = vector.load %arg6[%c0_13, %c0_14] : memref<16x512xf32, #tpu.memory_space<vmem>>, vector<16x512xf32>
      %cst_15 = arith.constant dense<0.000000e+00> : vector<512xf32>
      %126 = vector.multi_reduction <add>, %124, %cst_15 [0] : vector<8x512xf32> to vector<512xf32>
      %127 = vector.shape_cast %126 : vector<512xf32> to vector<1x512xf32>
      %cst_16 = arith.constant 8.000000e+00 : f32
      %128 = vector.broadcast %cst_16 : f32 to vector<1x512xf32>
      %129 = arith.divf %127, %128 : vector<1x512xf32>
      %130 = vector.broadcast %129 : vector<1x512xf32> to vector<8x512xf32>
      %131 = arith.subf %124, %130 : vector<8x512xf32>
      %cst_17 = arith.constant 0.377964467 : f32
      %132 = vector.broadcast %cst_17 : f32 to vector<8x512xf32>
      %133 = arith.mulf %131, %132 : vector<8x512xf32>
      %cst_18 = arith.constant dense<0.000000e+00> : vector<512xf32>
      %134 = vector.multi_reduction <add>, %125, %cst_18 [0] : vector<16x512xf32> to vector<512xf32>
      %135 = vector.shape_cast %134 : vector<512xf32> to vector<1x512xf32>
      %cst_19 = arith.constant 1.600000e+01 : f32
      %136 = vector.broadcast %cst_19 : f32 to vector<1x512xf32>
      %137 = arith.divf %135, %136 : vector<1x512xf32>
      %138 = vector.broadcast %137 : vector<1x512xf32> to vector<16x512xf32>
      %139 = arith.subf %125, %138 : vector<16x512xf32>
      %cst_20 = arith.constant 0.258198887 : f32
      %140 = vector.broadcast %cst_20 : f32 to vector<16x512xf32>
      %141 = arith.mulf %139, %140 : vector<16x512xf32>
      %142 = vector.extract_strided_slice %133 {offsets = [0, 0], sizes = [8, 256], strides = [1, 1]} : vector<8x512xf32> to vector<8x256xf32>
      %143 = vector.extract_strided_slice %141 {offsets = [0, 0], sizes = [16, 256], strides = [1, 1]} : vector<16x512xf32> to vector<16x256xf32>
      %c0_21 = arith.constant 0 : index
      %c0_22 = arith.constant 0 : index
      %c0_23 = arith.constant 0 : index
      %144 = vector.load %arg8[%c0_21, %c0_22, %c0_23] : memref<2x24x256xf32, #tpu.memory_space<vmem>>, vector<1x8x256xf32>
      %145 = vector.shape_cast %144 : vector<1x8x256xf32> to vector<8x256xf32>
      %146 = vector.shape_cast %142 : vector<8x256xf32> to vector<1x8x256xf32>
      tpu.vector_store %arg8[%c0_21, %c0_22, %c0_23], %146 {strides = array<i32>} : memref<2x24x256xf32, #tpu.memory_space<vmem>>, vector<1x8x256xf32>,
      %c0_24 = arith.constant 0 : index
      %c8 = arith.constant 8 : index
      %c0_25 = arith.constant 0 : index
      %147 = vector.load %arg8[%c0_24, %c8, %c0_25] : memref<2x24x256xf32, #tpu.memory_space<vmem>>, vector<1x16x256xf32>
      %148 = vector.shape_cast %147 : vector<1x16x256xf32> to vector<16x256xf32>
      %149 = vector.shape_cast %143 : vector<16x256xf32> to vector<1x16x256xf32>
      tpu.vector_store %arg8[%c0_24, %c8, %c0_25], %149 {strides = array<i32>} : memref<2x24x256xf32, #tpu.memory_space<vmem>>, vector<1x16x256xf32>,
      %c0_26 = arith.constant 0 : index
      %c0_27 = arith.constant 0 : index
      %c0_28 = arith.constant 0 : index
      %150 = vector.load %arg9[%c0_26, %c0_27, %c0_28] : memref<2x24x256xf32, #tpu.memory_space<vmem>>, vector<1x8x256xf32>
      %151 = vector.shape_cast %150 : vector<1x8x256xf32> to vector<8x256xf32>
      %152 = vector.shape_cast %142 : vector<8x256xf32> to vector<1x8x256xf32>
      tpu.vector_store %arg9[%c0_26, %c0_27, %c0_28], %152 {strides = array<i32>} : memref<2x24x256xf32, #tpu.memory_space<vmem>>, vector<1x8x256xf32>,
      %cst_29 = arith.constant 0.000000e+00 : f32
      %153 = vector.broadcast %cst_29 : f32 to vector<16x256xf32>
      %154 = arith.subf %153, %143 : vector<16x256xf32>
      %c0_30 = arith.constant 0 : index
      %c8_31 = arith.constant 8 : index
      %c0_32 = arith.constant 0 : index
      %155 = vector.load %arg9[%c0_30, %c8_31, %c0_32] : memref<2x24x256xf32, #tpu.memory_space<vmem>>, vector<1x16x256xf32>
      %156 = vector.shape_cast %155 : vector<1x16x256xf32> to vector<16x256xf32>
      %157 = vector.shape_cast %154 : vector<16x256xf32> to vector<1x16x256xf32>
      tpu.vector_store %arg9[%c0_30, %c8_31, %c0_32], %157 {strides = array<i32>} : memref<2x24x256xf32, #tpu.memory_space<vmem>>, vector<1x16x256xf32>,
      %158 = vector.extract_strided_slice %133 {offsets = [0, 256], sizes = [8, 256], strides = [1, 1]} : vector<8x512xf32> to vector<8x256xf32>
      %159 = vector.extract_strided_slice %141 {offsets = [0, 256], sizes = [16, 256], strides = [1, 1]} : vector<16x512xf32> to vector<16x256xf32>
      %c1 = arith.constant 1 : index
      %c0_33 = arith.constant 0 : index
      %c0_34 = arith.constant 0 : index
      %160 = vector.load %arg8[%c1, %c0_33, %c0_34] : memref<2x24x256xf32, #tpu.memory_space<vmem>>, vector<1x8x256xf32>
      %161 = vector.shape_cast %160 : vector<1x8x256xf32> to vector<8x256xf32>
      %162 = vector.shape_cast %158 : vector<8x256xf32> to vector<1x8x256xf32>
      tpu.vector_store %arg8[%c1, %c0_33, %c0_34], %162 {strides = array<i32>} : memref<2x24x256xf32, #tpu.memory_space<vmem>>, vector<1x8x256xf32>,
      %c1_35 = arith.constant 1 : index
      %c8_36 = arith.constant 8 : index
      %c0_37 = arith.constant 0 : index
      %163 = vector.load %arg8[%c1_35, %c8_36, %c0_37] : memref<2x24x256xf32, #tpu.memory_space<vmem>>, vector<1x16x256xf32>
      %164 = vector.shape_cast %163 : vector<1x16x256xf32> to vector<16x256xf32>
      %165 = vector.shape_cast %159 : vector<16x256xf32> to vector<1x16x256xf32>
      tpu.vector_store %arg8[%c1_35, %c8_36, %c0_37], %165 {strides = array<i32>} : memref<2x24x256xf32, #tpu.memory_space<vmem>>, vector<1x16x256xf32>,
      %c1_38 = arith.constant 1 : index
      %c0_39 = arith.constant 0 : index
      %c0_40 = arith.constant 0 : index
      %166 = vector.load %arg9[%c1_38, %c0_39, %c0_40] : memref<2x24x256xf32, #tpu.memory_space<vmem>>, vector<1x8x256xf32>
      %167 = vector.shape_cast %166 : vector<1x8x256xf32> to vector<8x256xf32>
      %168 = vector.shape_cast %158 : vector<8x256xf32> to vector<1x8x256xf32>
      tpu.vector_store %arg9[%c1_38, %c0_39, %c0_40], %168 {strides = array<i32>} : memref<2x24x256xf32, #tpu.memory_space<vmem>>, vector<1x8x256xf32>,
      %cst_41 = arith.constant 0.000000e+00 : f32
      %169 = vector.broadcast %cst_41 : f32 to vector<16x256xf32>
      %170 = arith.subf %169, %159 : vector<16x256xf32>
      %c1_42 = arith.constant 1 : index
      %c8_43 = arith.constant 8 : index
      %c0_44 = arith.constant 0 : index
      %171 = vector.load %arg9[%c1_42, %c8_43, %c0_44] : memref<2x24x256xf32, #tpu.memory_space<vmem>>, vector<1x16x256xf32>
      %172 = vector.shape_cast %171 : vector<1x16x256xf32> to vector<16x256xf32>
      %173 = vector.shape_cast %170 : vector<16x256xf32> to vector<1x16x256xf32>
      tpu.vector_store %arg9[%c1_42, %c8_43, %c0_44], %173 {strides = array<i32>} : memref<2x24x256xf32, #tpu.memory_space<vmem>>, vector<1x16x256xf32>,
    } else {
    }
    %5 = arith.index_cast %1 : i32 to index
    %6 = memref.load %arg2[%5] : memref<4xi32, #tpu.memory_space<smem>>
    %7 = arith.index_cast %1 : i32 to index
    %8 = memref.load %arg3[%7] : memref<4xi32, #tpu.memory_space<smem>>
    %9 = arith.index_cast %1 : i32 to index
    %10 = memref.load %arg4[%9] : memref<4xi32, #tpu.memory_space<smem>>
    %11 = arith.sitofp %10 : i32 to f32
    %12 = arith.index_cast %6 : i32 to index
    %c0 = arith.constant 0 : index
    %c0_1 = arith.constant 0 : index
    %13 = vector.load %arg8[%12, %c0, %c0_1] : memref<2x24x256xf32, #tpu.memory_space<vmem>>, vector<1x24x256xf32>
    %14 = vector.shape_cast %13 : vector<1x24x256xf32> to vector<24x256xf32>
    %15 = arith.index_cast %8 : i32 to index
    %c0_2 = arith.constant 0 : index
    %c0_3 = arith.constant 0 : index
    %16 = vector.load %arg9[%15, %c0_2, %c0_3] : memref<2x24x256xf32, #tpu.memory_space<vmem>>, vector<1x24x256xf32>
    %17 = vector.shape_cast %16 : vector<1x24x256xf32> to vector<24x256xf32>
    %cst = arith.constant dense<0.000000e+00> : vector<256x256xf32>
    %18 = tpu.matmul %14, %17, %cst {dimension_numbers = #tpu.dot_dimension_numbers<[0], [0], [1], [1], [0, 1, 1, 1], [], []>} : vector<24x256xf32>, vector<24x256xf32>, vector<256x256xf32> -> vector<256x256xf32>
    %19 = vector.extract_strided_slice %18 {offsets = [0, 0], sizes = [8, 256], strides = [1, 1]} : vector<256x256xf32> to vector<8x256xf32>
    %20 = arith.mulf %19, %19 : vector<8x256xf32>
    %21 = vector.extract_strided_slice %18 {offsets = [8, 0], sizes = [8, 256], strides = [1, 1]} : vector<256x256xf32> to vector<8x256xf32>
    %22 = arith.mulf %21, %21 : vector<8x256xf32>
    %23 = arith.addf %20, %22 : vector<8x256xf32>
    %24 = vector.extract_strided_slice %18 {offsets = [16, 0], sizes = [8, 256], strides = [1, 1]} : vector<256x256xf32> to vector<8x256xf32>
    %25 = arith.mulf %24, %24 : vector<8x256xf32>
    %26 = arith.addf %23, %25 : vector<8x256xf32>
    %27 = vector.extract_strided_slice %18 {offsets = [24, 0], sizes = [8, 256], strides = [1, 1]} : vector<256x256xf32> to vector<8x256xf32>
    %28 = arith.mulf %27, %27 : vector<8x256xf32>
    %29 = arith.addf %26, %28 : vector<8x256xf32>
    %30 = vector.extract_strided_slice %18 {offsets = [32, 0], sizes = [8, 256], strides = [1, 1]} : vector<256x256xf32> to vector<8x256xf32>
    %31 = arith.mulf %30, %30 : vector<8x256xf32>
    %32 = arith.addf %29, %31 : vector<8x256xf32>
    %33 = vector.extract_strided_slice %18 {offsets = [40, 0], sizes = [8, 256], strides = [1, 1]} : vector<256x256xf32> to vector<8x256xf32>
    %34 = arith.mulf %33, %33 : vector<8x256xf32>
    %35 = arith.addf %32, %34 : vector<8x256xf32>
    %36 = vector.extract_strided_slice %18 {offsets = [48, 0], sizes = [8, 256], strides = [1, 1]} : vector<256x256xf32> to vector<8x256xf32>
    %37 = arith.mulf %36, %36 : vector<8x256xf32>
    %38 = arith.addf %35, %37 : vector<8x256xf32>
    %39 = vector.extract_strided_slice %18 {offsets = [56, 0], sizes = [8, 256], strides = [1, 1]} : vector<256x256xf32> to vector<8x256xf32>
    %40 = arith.mulf %39, %39 : vector<8x256xf32>
    %41 = arith.addf %38, %40 : vector<8x256xf32>
    %42 = vector.extract_strided_slice %18 {offsets = [64, 0], sizes = [8, 256], strides = [1, 1]} : vector<256x256xf32> to vector<8x256xf32>
    %43 = arith.mulf %42, %42 : vector<8x256xf32>
    %44 = arith.addf %41, %43 : vector<8x256xf32>
    %45 = vector.extract_strided_slice %18 {offsets = [72, 0], sizes = [8, 256], strides = [1, 1]} : vector<256x256xf32> to vector<8x256xf32>
    %46 = arith.mulf %45, %45 : vector<8x256xf32>
    %47 = arith.addf %44, %46 : vector<8x256xf32>
    %48 = vector.extract_strided_slice %18 {offsets = [80, 0], sizes = [8, 256], strides = [1, 1]} : vector<256x256xf32> to vector<8x256xf32>
    %49 = arith.mulf %48, %48 : vector<8x256xf32>
    %50 = arith.addf %47, %49 : vector<8x256xf32>
    %51 = vector.extract_strided_slice %18 {offsets = [88, 0], sizes = [8, 256], strides = [1, 1]} : vector<256x256xf32> to vector<8x256xf32>
    %52 = arith.mulf %51, %51 : vector<8x256xf32>
    %53 = arith.addf %50, %52 : vector<8x256xf32>
    %54 = vector.extract_strided_slice %18 {offsets = [96, 0], sizes = [8, 256], strides = [1, 1]} : vector<256x256xf32> to vector<8x256xf32>
    %55 = arith.mulf %54, %54 : vector<8x256xf32>
    %56 = arith.addf %53, %55 : vector<8x256xf32>
    %57 = vector.extract_strided_slice %18 {offsets = [104, 0], sizes = [8, 256], strides = [1, 1]} : vector<256x256xf32> to vector<8x256xf32>
    %58 = arith.mulf %57, %57 : vector<8x256xf32>
    %59 = arith.addf %56, %58 : vector<8x256xf32>
    %60 = vector.extract_strided_slice %18 {offsets = [112, 0], sizes = [8, 256], strides = [1, 1]} : vector<256x256xf32> to vector<8x256xf32>
    %61 = arith.mulf %60, %60 : vector<8x256xf32>
    %62 = arith.addf %59, %61 : vector<8x256xf32>
    %63 = vector.extract_strided_slice %18 {offsets = [120, 0], sizes = [8, 256], strides = [1, 1]} : vector<256x256xf32> to vector<8x256xf32>
    %64 = arith.mulf %63, %63 : vector<8x256xf32>
    %65 = arith.addf %62, %64 : vector<8x256xf32>
    %66 = vector.extract_strided_slice %18 {offsets = [128, 0], sizes = [8, 256], strides = [1, 1]} : vector<256x256xf32> to vector<8x256xf32>
    %67 = arith.mulf %66, %66 : vector<8x256xf32>
    %68 = arith.addf %65, %67 : vector<8x256xf32>
    %69 = vector.extract_strided_slice %18 {offsets = [136, 0], sizes = [8, 256], strides = [1, 1]} : vector<256x256xf32> to vector<8x256xf32>
    %70 = arith.mulf %69, %69 : vector<8x256xf32>
    %71 = arith.addf %68, %70 : vector<8x256xf32>
    %72 = vector.extract_strided_slice %18 {offsets = [144, 0], sizes = [8, 256], strides = [1, 1]} : vector<256x256xf32> to vector<8x256xf32>
    %73 = arith.mulf %72, %72 : vector<8x256xf32>
    %74 = arith.addf %71, %73 : vector<8x256xf32>
    %75 = vector.extract_strided_slice %18 {offsets = [152, 0], sizes = [8, 256], strides = [1, 1]} : vector<256x256xf32> to vector<8x256xf32>
    %76 = arith.mulf %75, %75 : vector<8x256xf32>
    %77 = arith.addf %74, %76 : vector<8x256xf32>
    %78 = vector.extract_strided_slice %18 {offsets = [160, 0], sizes = [8, 256], strides = [1, 1]} : vector<256x256xf32> to vector<8x256xf32>
    %79 = arith.mulf %78, %78 : vector<8x256xf32>
    %80 = arith.addf %77, %79 : vector<8x256xf32>
    %81 = vector.extract_strided_slice %18 {offsets = [168, 0], sizes = [8, 256], strides = [1, 1]} : vector<256x256xf32> to vector<8x256xf32>
    %82 = arith.mulf %81, %81 : vector<8x256xf32>
    %83 = arith.addf %80, %82 : vector<8x256xf32>
    %84 = vector.extract_strided_slice %18 {offsets = [176, 0], sizes = [8, 256], strides = [1, 1]} : vector<256x256xf32> to vector<8x256xf32>
    %85 = arith.mulf %84, %84 : vector<8x256xf32>
    %86 = arith.addf %83, %85 : vector<8x256xf32>
    %87 = vector.extract_strided_slice %18 {offsets = [184, 0], sizes = [8, 256], strides = [1, 1]} : vector<256x256xf32> to vector<8x256xf32>
    %88 = arith.mulf %87, %87 : vector<8x256xf32>
    %89 = arith.addf %86, %88 : vector<8x256xf32>
    %90 = vector.extract_strided_slice %18 {offsets = [192, 0], sizes = [8, 256], strides = [1, 1]} : vector<256x256xf32> to vector<8x256xf32>
    %91 = arith.mulf %90, %90 : vector<8x256xf32>
    %92 = arith.addf %89, %91 : vector<8x256xf32>
    %93 = vector.extract_strided_slice %18 {offsets = [200, 0], sizes = [8, 256], strides = [1, 1]} : vector<256x256xf32> to vector<8x256xf32>
    %94 = arith.mulf %93, %93 : vector<8x256xf32>
    %95 = arith.addf %92, %94 : vector<8x256xf32>
    %96 = vector.extract_strided_slice %18 {offsets = [208, 0], sizes = [8, 256], strides = [1, 1]} : vector<256x256xf32> to vector<8x256xf32>
    %97 = arith.mulf %96, %96 : vector<8x256xf32>
    %98 = arith.addf %95, %97 : vector<8x256xf32>
    %99 = vector.extract_strided_slice %18 {offsets = [216, 0], sizes = [8, 256], strides = [1, 1]} : vector<256x256xf32> to vector<8x256xf32>
    %100 = arith.mulf %99, %99 : vector<8x256xf32>
    %101 = arith.addf %98, %100 : vector<8x256xf32>
    %102 = vector.extract_strided_slice %18 {offsets = [224, 0], sizes = [8, 256], strides = [1, 1]} : vector<256x256xf32> to vector<8x256xf32>
    %103 = arith.mulf %102, %102 : vector<8x256xf32>
    %104 = arith.addf %101, %103 : vector<8x256xf32>
    %105 = vector.extract_strided_slice %18 {offsets = [232, 0], sizes = [8, 256], strides = [1, 1]} : vector<256x256xf32> to vector<8x256xf32>
    %106 = arith.mulf %105, %105 : vector<8x256xf32>
    %107 = arith.addf %104, %106 : vector<8x256xf32>
    %108 = vector.extract_strided_slice %18 {offsets = [240, 0], sizes = [8, 256], strides = [1, 1]} : vector<256x256xf32> to vector<8x256xf32>
    %109 = arith.mulf %108, %108 : vector<8x256xf32>
    %110 = arith.addf %107, %109 : vector<8x256xf32>
    %111 = vector.extract_strided_slice %18 {offsets = [248, 0], sizes = [8, 256], strides = [1, 1]} : vector<256x256xf32> to vector<8x256xf32>
    %112 = arith.mulf %111, %111 : vector<8x256xf32>
    %113 = arith.addf %110, %112 : vector<8x256xf32>
    %114 = vector.extract_strided_slice %113 {offsets = [0, 0], sizes = [8, 128], strides = [1, 1]} : vector<8x256xf32> to vector<8x128xf32>
    %115 = vector.extract_strided_slice %113 {offsets = [0, 128], sizes = [8, 128], strides = [1, 1]} : vector<8x256xf32> to vector<8x128xf32>
    %116 = arith.addf %114, %115 : vector<8x128xf32>
    %c0_4 = arith.constant 0 : index
    %c0_5 = arith.constant 0 : index
    %117 = vector.load %arg7[%c0_4, %c0_5] : memref<8x128xf32, #tpu.memory_space<vmem>>, vector<8x128xf32>
    %118 = vector.broadcast %11 : f32 to vector<8x128xf32>
    %119 = arith.mulf %118, %116 : vector<8x128xf32>
    %120 = arith.addf %117, %119 : vector<8x128xf32>
    %c0_6 = arith.constant 0 : index
    %c0_7 = arith.constant 0 : index
    %121 = vector.load %arg7[%c0_6, %c0_7] : memref<8x128xf32, #tpu.memory_space<vmem>>, vector<8x128xf32>
    tpu.vector_store %arg7[%c0_6, %c0_7], %120 {strides = array<i32>} : memref<8x128xf32, #tpu.memory_space<vmem>>, vector<8x128xf32>,
    return
  }
  func.func @transform_0(%arg0: i32, %arg1: i32, %arg2: memref<4xi32, #tpu.memory_space<smem>>, %arg3: memref<4xi32, #tpu.memory_space<smem>>, %arg4: memref<4xi32, #tpu.memory_space<smem>>) -> (i32, i32) {
    %c0_i32 = arith.constant 0 : i32
    %c0_i32_0 = arith.constant 0 : i32
    %c0_i32_1 = arith.constant 0 : i32
    return %c0_i32, %c0_i32_0 : i32, i32
  }
  func.func @transform_1(%arg0: i32, %arg1: i32, %arg2: memref<4xi32, #tpu.memory_space<smem>>, %arg3: memref<4xi32, #tpu.memory_space<smem>>, %arg4: memref<4xi32, #tpu.memory_space<smem>>) -> (i32, i32) {
    %c0_i32 = arith.constant 0 : i32
    %c0_i32_0 = arith.constant 0 : i32
    %c0_i32_1 = arith.constant 0 : i32
    return %c0_i32, %c0_i32_0 : i32, i32
  }
  func.func @transform_2(%arg0: i32, %arg1: i32, %arg2: memref<4xi32, #tpu.memory_space<smem>>, %arg3: memref<4xi32, #tpu.memory_space<smem>>, %arg4: memref<4xi32, #tpu.memory_space<smem>>) -> (i32, i32) {
    %c0_i32 = arith.constant 0 : i32
    %c0_i32_0 = arith.constant 0 : i32
    return %arg0, %c0_i32 : i32, i32
  }
}

</mosaic_0001>

<llo_original>
// kernel: tpu_custom_call.1
$region0: #{tpu_custom_call.1}
  #allocation0 [shape = 'u32[]', space=smem, size = 0x4, offset = 0x4, fixed_abs, tag = 'smem constant byte address 0x4 - core index']
  #allocation1 [shape = 'u32[144,128]{1,0:T(1,128)}', space=vmem, size = 0x12000, scoped, tag = 'internal scratch']
  #allocation2 [shape = 'f32[2,24,256]{2,1,0:T(8,128)}', space=vmem, size = 0xc000, scoped, tag = 'scratch operand']
  #allocation3 [shape = 'f32[2,24,256]{2,1,0:T(8,128)}', space=vmem, size = 0xc000, scoped, tag = 'scratch operand']
  #allocation4 [shape = 's32[1]{0}', space=sflag, size = 0x4, scoped, tag = 'scoped memory for tpu_custom_call.1']
  #allocation5 [shape = 'u8[512]{0}', space=smem, size = 0x200, scoped, tag = 'prefetched SMEM operand 0']
  #allocation6 [shape = 'u8[512]{0}', space=smem, size = 0x200, scoped, tag = 'prefetched SMEM operand 1']
  #allocation7 [shape = 'u8[512]{0}', space=smem, size = 0x200, scoped, tag = 'prefetched SMEM operand 2']
  %s0 = inlined_call_operand.hbm [shape: s32[4], index: 0, kind: input, shape index: {}]
  %s1 = inlined_call_operand.vmem [shape: s32[4], index: 1, kind: input, shape index: {}]
  %s2 = inlined_call_operand.vmem [shape: s32[4], index: 2, kind: input, shape index: {}]
  %s3 = inlined_call_operand.hbm [shape: f32[8,512], index: 3, kind: input, shape index: {}]
  %s4 = inlined_call_operand.hbm [shape: f32[16,512], index: 4, kind: input, shape index: {}]
  %s5 = inlined_call_operand.hbm [shape: f32[16,128], index: 5, kind: output, shape index: {}]
  %s6 = sld [smem:[#allocation0]]
  $region53: #{tpu_custom_call.1} parent=0
    _
  %s8 = ssub.s32 1, %s6
  %s9 = scalar_select 0, %s8, %s6
  %11 = dma.hbm_to_smem %s0, 16, [#allocation5], [#allocation4]
  %s12 = sshll.u32 %s1, 4
  %s13 = int_to_ptr.vmem [resolvable:$true] %s12
  %15 = dma.vmem_to_smem %s13, 16, [#allocation6], [#allocation4]
  %s16 = sshll.u32 %s2, 4
  %s17 = int_to_ptr.vmem [resolvable:$true] %s16
  %19 = dma.vmem_to_smem %s17, 16, [#allocation7], [#allocation4]
  %20 = dma.done [#allocation4], 48
  %21 = sfence
  $region1: #{tpu_custom_call.1} parent=0
    #allocation8 [shape = 'u8[16384]{0}', space=vmem, size = 0x4000, scoped, tag = 'input window, operand 3, single buffered']
    #allocation9 [shape = 's32[2]{0}', space=sflag, size = 0x8, scoped, tag = 'scoped memory for tpu_custom_call.1']
    #allocation10 [shape = 's32[2]{0}', space=sflag, size = 0x8, scoped, tag = 'scoped memory for tpu_custom_call.1']
    #allocation11 [shape = 'u8[32768]{0}', space=vmem, size = 0x8000, scoped, tag = 'input window, operand 4, single buffered']
    #allocation12 [shape = 's32[1]{0}', space=sflag, size = 0x4, scoped, tag = 'scoped memory for tpu_custom_call.1']
    #allocation13 [shape = 'u8[8192]{0}', space=vmem, size = 0x2000, scoped, tag = 'output window, operand 0']
    %22 = vsyncpa [#allocation9], 0
    %23 = vsyncpa [#allocation12], 0
    %24 = vsyncpa [#allocation10], 0
    %s25 = scalar_lea.sflag [#allocation10], 1
    %26 = vsyncpa %s25, 0
    loop: start=0, step=1, limit=6
    $region2: #{tpu_custom_call.1} parent=1 // loop_pre_header
      _
    $region3: #{tpu_custom_call.1} parent=1 // loop_header
      %s28 = sphi 0, %s32
      %p29 = scmp.ge.s32.totalorder %s28, 6
      %s35 = sphi 0, %s47
      %s36 = sphi 0, %s43
      %s37 = sphi 0, %s35
      %s38 = sphi 0, %s36
      %s39 = sphi 0, %s37
      %s40 = sphi 0, %s38
      %s48 = sphi 0, %s48
      %s50 = sphi 0, %s48
      %s51 = sphi 0, %s50
      %s65 = sphi 0, %s51
      %s69 = sphi 0, %s69
      %s71 = sphi 0, %s69
      %s72 = sphi 0, %s71
      %s86 = sphi 0, %s72
      %s92 = sphi 0, %s94
      %s95 = sphi 0, %s92
      %s96 = sphi 0, %s95
      %s112 = sphi 0, %s96
    $region4: #{tpu_custom_call.1} parent=1 // loop_header_branch
      %31 = sbr.rel (%p29) target = $region8
    $region5: #{tpu_custom_call.1} parent=1 // loop_body
      %s33 = ssub.s32 %s28, 1
      %s34 = ssub.s32 %s28, 2
      %s41 = sadd.s32 1, %s36
      %p42 = scmp.ge.s32.totalorder %s41, 2
      %s43 = scalar_select %p42, 0, %s41
      %s44 = sadd.s32 1, %s35
      %s45 = scalar_select %p42, %s44, %s35
      %p46 = scmp.ge.s32.totalorder %s45, 2
      %s47 = scalar_select %p46, 0, %s45
      %s49 = sadd.s32 %s48, 1
      %p52 = scmp.eq.s32.totalorder %s28, 3
      %p53 = scmp.ne.s32.totalorder %s48, %s50
      %p54 = scmp.eq.s32.totalorder %s28, 0
      %p55 = por %p53, %p54
      %p56 = scmp.ne.s32.totalorder %s48, %s50
      %p57 = scmp.eq.s32.totalorder %s33, 3
      %p58 = por %p56, %p57
      %p59 = scmp.ne.s32.totalorder %s50, %s51
      %p60 = scmp.eq.s32.totalorder %s33, 0
      %p61 = por %p59, %p60
      %p62 = scmp.ne.s32.totalorder %s50, %s51
      %p63 = scmp.eq.s32.totalorder %s34, 3
      %p64 = por %p62, %p63
      %p66 = scmp.ne.s32.totalorder %s51, %s65
      %p67 = scmp.eq.s32.totalorder %s34, 0
      %p68 = por %p66, %p67
      %s70 = sadd.s32 %s69, 1
      %p73 = scmp.eq.s32.totalorder %s28, 3
      %p74 = scmp.ne.s32.totalorder %s69, %s71
      %p75 = scmp.eq.s32.totalorder %s28, 0
      %p76 = por %p74, %p75
      %p77 = scmp.ne.s32.totalorder %s69, %s71
      %p78 = scmp.eq.s32.totalorder %s33, 3
      %p79 = por %p77, %p78
      %p80 = scmp.ne.s32.totalorder %s71, %s72
      %p81 = scmp.eq.s32.totalorder %s33, 0
      %p82 = por %p80, %p81
      %p83 = scmp.ne.s32.totalorder %s71, %s72
      %p84 = scmp.eq.s32.totalorder %s34, 3
      %p85 = por %p83, %p84
      %p87 = scmp.ne.s32.totalorder %s72, %s86
      %p88 = scmp.eq.s32.totalorder %s34, 0
      %p89 = por %p87, %p88
      %s90 = ssub.s32 %s35, %s47
      %p91 = scmp.eq.s32.totalorder %s90, 0
      %s93 = sadd.s32 %s92, 1
      %s94 = scalar_select %p91, %s92, %s93
      %p97 = pneg %p91
      %p98 = scmp.eq.s32.totalorder %s28, 3
      %p99 = por %p97, %p98
      %p100 = scmp.ne.s32.totalorder %s92, %s95
      %p101 = scmp.eq.s32.totalorder %s28, 0
      %p102 = por %p100, %p101
      %p103 = scmp.ne.s32.totalorder %s92, %s95
      %p104 = scmp.eq.s32.totalorder %s33, 3
      %p105 = por %p103, %p104
      %p106 = scmp.ne.s32.totalorder %s95, %s96
      %p107 = scmp.eq.s32.totalorder %s33, 0
      %p108 = por %p106, %p107
      %p109 = scmp.ne.s32.totalorder %s95, %s96
      %p110 = scmp.eq.s32.totalorder %s34, 3
      %p111 = por %p109, %p110
      %p113 = scmp.ne.s32.totalorder %s96, %s112
      %p114 = scmp.eq.s32.totalorder %s34, 0
      %p115 = por %p113, %p114
      %p116 = scmp.le.s32.totalorder 1, %s28
      %p117 = scmp.lt.s32.totalorder %s28, 5
      %p118 = pnand %p116, %p117
      %p119 = pneg %p118
      // Predicated region
      $region9: #{tpu_custom_call.1} parent=5 // pred_check
        _
      $region10: #{tpu_custom_call.1} parent=5 // pred_check_branch
        %121 = sbr.rel (%p118) target = $region12
      $region11: #{tpu_custom_call.1} parent=5 // pred_region
        %s122 = ssub.s32 %s28, 1
        // Predicated region
        $region13: #{tpu_custom_call.1} parent=11 // pred_check
          %p123 = pneg %p61
        $region14: #{tpu_custom_call.1} parent=11 // pred_check_branch
          %125 = sbr.rel (%p123) target = $region16
        $region15: #{tpu_custom_call.1} parent=11 // pred_region
          %s127 = ssub.s32 512, 512
          %128 = vsyncadd [#allocation9], %s127
          %s130 = sshll.u32 [#allocation8], 4
          %s131 = int_to_ptr.vmem [resolvable:$true] %s130
          %133 = dma.hbm_to_vmem [thread:$0]  %s3, 512, %s131, [#allocation9]
        $region16: #{tpu_custom_call.1} parent=11 // pred_fallthru
          _
        // Predicated region
        $region17: #{tpu_custom_call.1} parent=11 // pred_check
          %p134 = pneg %p82
        $region18: #{tpu_custom_call.1} parent=11 // pred_check_branch
          %136 = sbr.rel (%p134) target = $region20
        $region19: #{tpu_custom_call.1} parent=11 // pred_region
          %s138 = ssub.s32 1024, 1024
          %139 = vsyncadd [#allocation12], %s138
          %s140 = sshll.u32 [#allocation11], 4
          %s141 = int_to_ptr.vmem [resolvable:$true] %s140
          %146 = dma.hbm_to_vmem [thread:$0]  %s4, 1024, %s141, [#allocation12], 512, 512, 32
        $region20: #{tpu_custom_call.1} parent=11 // pred_fallthru
          _
      $region12: #{tpu_custom_call.1} parent=5 // pred_fallthru
        _
      %p147 = scmp.lt.s32.totalorder %s28, 4
      // Predicated region
      $region21: #{tpu_custom_call.1} parent=5 // pred_check
        %p148 = pneg %p147
      $region22: #{tpu_custom_call.1} parent=5 // pred_check_branch
        %150 = sbr.rel (%p148) target = $region24
      $region23: #{tpu_custom_call.1} parent=5 // pred_region
        _
      $region24: #{tpu_custom_call.1} parent=5 // pred_fallthru
        _
      %p151 = scmp.le.s32.totalorder 1, %s28
      %p152 = scmp.lt.s32.totalorder %s28, 5
      %p153 = pnand %p151, %p152
      %p154 = pneg %p153
      // Predicated region
      $region25: #{tpu_custom_call.1} parent=5 // pred_check
        _
      $region26: #{tpu_custom_call.1} parent=5 // pred_check_branch
        %156 = sbr.rel (%p153) target = $region28
      $region27: #{tpu_custom_call.1} parent=5 // pred_region
        %s157 = ssub.s32 %s28, 1
        // Predicated region
        $region29: #{tpu_custom_call.1} parent=27 // pred_check
          %p158 = pneg %p61
        $region30: #{tpu_custom_call.1} parent=27 // pred_check_branch
          %160 = sbr.rel (%p158) target = $region32
        $region31: #{tpu_custom_call.1} parent=27 // pred_region
          %161 = dma.done [#allocation9], 512
        $region32: #{tpu_custom_call.1} parent=27 // pred_fallthru
          _
        // Predicated region
        $region33: #{tpu_custom_call.1} parent=27 // pred_check
          %p162 = pneg %p82
        $region34: #{tpu_custom_call.1} parent=27 // pred_check_branch
          %164 = sbr.rel (%p162) target = $region36
        $region35: #{tpu_custom_call.1} parent=27 // pred_region
          %165 = dma.done [#allocation12], 1024
        $region36: #{tpu_custom_call.1} parent=27 // pred_fallthru
          _
        %p166 = pneg %p61
        %p167 = pneg %p58
        %p168 = pneg %p82
        %p169 = pneg %p79
        %p170 = pneg %p108
        %p171 = pneg %p105
        %s172 = sand.u32 %s95, 1
        %s173 = scalar_lea.sflag [#allocation10], %s172
        %s174 = sand.u32 %s95, 1
        %s175 = smul.addr %s174, 8
        %s176 = scalar_lea.vmem [#allocation13], %s175
        %s177 = smul.u32 %s37, 2
        %s178 = sadd.s32 %s177, %s38
        %p179 = scmp.eq.s32.totalorder %s38, 0
        // Predicated region
        $region37: #{tpu_custom_call.1} parent=27 // pred_check
          %p180 = pneg %p179
        $region38: #{tpu_custom_call.1} parent=27 // pred_check_branch
          %182 = sbr.rel (%p180) target = $region40
        $region39: #{tpu_custom_call.1} parent=27 // pred_region
          %183 = vst [vmem:[%s176] sm:$0xff] 0.0
          %v184 = vld [vmem:[#allocation8] sm:$0xff]
          %v185 = vld [vmem:[#allocation8 + $0x8] sm:$0xff]
          %v186 = vld [vmem:[#allocation8 + $0x10] sm:$0xff]
          %v187 = vld [vmem:[#allocation8 + $0x18] sm:$0xff]
          %v188 = vld [vmem:[#allocation11] sm:$0xff]
          %v189 = vld [vmem:[#allocation11 + $0x8] sm:$0xff]
          %v190 = vld [vmem:[#allocation11 + $0x10] sm:$0xff]
          %v191 = vld [vmem:[#allocation11 + $0x18] sm:$0xff]
          %v192 = vld [vmem:[#allocation11 + $0x20] sm:$0xff]
          %v193 = vld [vmem:[#allocation11 + $0x28] sm:$0xff]
          %v194 = vld [vmem:[#allocation11 + $0x30] sm:$0xff]
          %v195 = vld [vmem:[#allocation11 + $0x38] sm:$0xff]
          %v196 = vrot.slane %v184, 4
          %v197 = vadd.f32 %v184, %v196
          %v198 = vrot.slane %v197, 2
          %v199 = vadd.f32 %v197, %v198
          %v200 = vrot.slane %v199, 1
          %v201 = vadd.f32 %v199, %v200
          %v202 = vrot.slane %v185, 4
          %v203 = vadd.f32 %v185, %v202
          %v204 = vrot.slane %v203, 2
          %v205 = vadd.f32 %v203, %v204
          %v206 = vrot.slane %v205, 1
          %v207 = vadd.f32 %v205, %v206
          %v208 = vrot.slane %v186, 4
          %v209 = vadd.f32 %v186, %v208
          %v210 = vrot.slane %v209, 2
          %v211 = vadd.f32 %v209, %v210
          %v212 = vrot.slane %v211, 1
          %v213 = vadd.f32 %v211, %v212
          %v214 = vrot.slane %v187, 4
          %v215 = vadd.f32 %v187, %v214
          %v216 = vrot.slane %v215, 2
          %v217 = vadd.f32 %v215, %v216
          %v218 = vrot.slane %v217, 1
          %v219 = vadd.f32 %v217, %v218
          %v220 = vrcp.pop 8.0
          %v221 = vmul.f32 %v201, %v220
          %v222 = vmul.f32 %v207, %v220
          %v223 = vmul.f32 %v213, %v220
          %v224 = vmul.f32 %v219, %v220
          %v225 = vsub.f32 %v184, %v221
          %v226 = vsub.f32 %v185, %v222
          %v227 = vsub.f32 %v186, %v223
          %v228 = vsub.f32 %v187, %v224
          %v229 = vmul.f32 %v225, 0.37796447
          %v230 = vmul.f32 %v226, 0.37796447
          %v231 = vmul.f32 %v227, 0.37796447
          %v232 = vmul.f32 %v228, 0.37796447
          %v233 = vadd.f32 %v188, %v192
          %v234 = vrot.slane %v233, 4
          %v235 = vadd.f32 %v233, %v234
          %v236 = vrot.slane %v235, 2
          %v237 = vadd.f32 %v235, %v236
          %v238 = vrot.slane %v237, 1
          %v239 = vadd.f32 %v237, %v238
          %v240 = vadd.f32 %v189, %v193
          %v241 = vrot.slane %v240, 4
          %v242 = vadd.f32 %v240, %v241
          %v243 = vrot.slane %v242, 2
          %v244 = vadd.f32 %v242, %v243
          %v245 = vrot.slane %v244, 1
          %v246 = vadd.f32 %v244, %v245
          %v247 = vadd.f32 %v190, %v194
          %v248 = vrot.slane %v247, 4
          %v249 = vadd.f32 %v247, %v248
          %v250 = vrot.slane %v249, 2
          %v251 = vadd.f32 %v249, %v250
          %v252 = vrot.slane %v251, 1
          %v253 = vadd.f32 %v251, %v252
          %v254 = vadd.f32 %v191, %v195
          %v255 = vrot.slane %v254, 4
          %v256 = vadd.f32 %v254, %v255
          %v257 = vrot.slane %v256, 2
          %v258 = vadd.f32 %v256, %v257
          %v259 = vrot.slane %v258, 1
          %v260 = vadd.f32 %v258, %v259
          %v261 = vrcp.pop 16.0
          %v262 = vmul.f32 %v239, %v261
          %v263 = vmul.f32 %v246, %v261
          %v264 = vmul.f32 %v253, %v261
          %v265 = vmul.f32 %v260, %v261
          %v266 = vsub.f32 %v188, %v262
          %v267 = vsub.f32 %v189, %v263
          %v268 = vsub.f32 %v190, %v264
          %v269 = vsub.f32 %v191, %v265
          %v270 = vsub.f32 %v192, %v262
          %v271 = vsub.f32 %v193, %v263
          %v272 = vsub.f32 %v194, %v264
          %v273 = vsub.f32 %v195, %v265
          %v274 = vmul.f32 %v266, 0.2581989
          %v275 = vmul.f32 %v267, 0.2581989
          %v276 = vmul.f32 %v268, 0.2581989
          %v277 = vmul.f32 %v269, 0.2581989
          %v278 = vmul.f32 %v270, 0.2581989
          %v279 = vmul.f32 %v271, 0.2581989
          %v280 = vmul.f32 %v272, 0.2581989
          %v281 = vmul.f32 %v273, 0.2581989
          %282 = vst [vmem:[#allocation2] sm:$0xff] %v229
          %283 = vst [vmem:[#allocation2 + $0x8] sm:$0xff] %v230
          %284 = vst [vmem:[#allocation2 + $0x10] sm:$0xff] %v274
          %285 = vst [vmem:[#allocation2 + $0x18] sm:$0xff] %v275
          %286 = vst [vmem:[#allocation2 + $0x20] sm:$0xff] %v278
          %287 = vst [vmem:[#allocation2 + $0x28] sm:$0xff] %v279
          %288 = vst [vmem:[#allocation3] sm:$0xff] %v229
          %289 = vst [vmem:[#allocation3 + $0x8] sm:$0xff] %v230
          %v290 = vsub.f32 0.0, %v274
          %v291 = vsub.f32 0.0, %v275
          %v292 = vsub.f32 0.0, %v278
          %v293 = vsub.f32 0.0, %v279
          %294 = vst [vmem:[#allocation3 + $0x10] sm:$0xff] %v290
          %295 = vst [vmem:[#allocation3 + $0x18] sm:$0xff] %v291
          %296 = vst [vmem:[#allocation3 + $0x20] sm:$0xff] %v292
          %297 = vst [vmem:[#allocation3 + $0x28] sm:$0xff] %v293
          %s298 = scalar_lea.vmem [#allocation2], 48
          %299 = vst [vmem:[%s298] sm:$0xff] %v231
          %300 = vst [vmem:[%s298 + $0x8] sm:$0xff] %v232
          %301 = vst [vmem:[%s298 + $0x10] sm:$0xff] %v276
          %302 = vst [vmem:[%s298 + $0x18] sm:$0xff] %v277
          %303 = vst [vmem:[%s298 + $0x20] sm:$0xff] %v280
          %304 = vst [vmem:[%s298 + $0x28] sm:$0xff] %v281
          %s305 = scalar_lea.vmem [#allocation3], 48
          %306 = vst [vmem:[%s305] sm:$0xff] %v231
          %307 = vst [vmem:[%s305 + $0x8] sm:$0xff] %v232
          %v308 = vsub.f32 0.0, %v276
          %v309 = vsub.f32 0.0, %v277
          %v310 = vsub.f32 0.0, %v280
          %v311 = vsub.f32 0.0, %v281
          %312 = vst [vmem:[%s305 + $0x10] sm:$0xff] %v308
          %313 = vst [vmem:[%s305 + $0x18] sm:$0xff] %v309
          %314 = vst [vmem:[%s305 + $0x20] sm:$0xff] %v310
          %315 = vst [vmem:[%s305 + $0x28] sm:$0xff] %v311
        $region40: #{tpu_custom_call.1} parent=27 // pred_fallthru
          _
        %s316 = sld [smem:[#allocation5 + %s178]]
        %s317 = sld [smem:[#allocation6 + %s178]]
        %s318 = sld [smem:[#allocation7 + %s178]]
        %s319 = scvt.s32.f32 %s318
        %s320 = smul.u32 %s316, 6
        %s321 = smul.addr %s320, 8
        %s322 = scalar_lea.vmem [#allocation2], %s321
        %v323 = vld [vmem:[%s322] sm:$0xff]
        %v324 = vld [vmem:[%s322 + $0x8] sm:$0xff]
        %v325 = vld [vmem:[%s322 + $0x10] sm:$0xff]
        %v326 = vld [vmem:[%s322 + $0x18] sm:$0xff]
        %v327 = vld [vmem:[%s322 + $0x20] sm:$0xff]
        %v328 = vld [vmem:[%s322 + $0x28] sm:$0xff]
        %s329 = smul.u32 %s317, 6
        %s330 = smul.addr %s329, 8
        %s331 = scalar_lea.vmem [#allocation3], %s330
        %v332 = vld [vmem:[%s331] sm:$0xff]
        %v333 = vld [vmem:[%s331 + $0x8] sm:$0xff]
        %v334 = vld [vmem:[%s331 + $0x10] sm:$0xff]
        %v335 = vld [vmem:[%s331 + $0x18] sm:$0xff]
        %v336 = vld [vmem:[%s331 + $0x20] sm:$0xff]
        %v337 = vld [vmem:[%s331 + $0x28] sm:$0xff]
        %338 = vxpose.xlu0.b32.start [1/16] %v323, 128
        %339 = vxpose.xlu0.b32.cont [2/16] %v325, 128
        %340 = vxpose.xlu0.b32.cont [3/16] %v327, 128
        %341 = vxpose.xlu0.b32.cont [4/16] 0.0, 128
        %342 = vxpose.xlu0.b32.cont [5/16] 0.0, 128
        %343 = vxpose.xlu0.b32.cont [6/16] 0.0, 128
        %344 = vxpose.xlu0.b32.cont [7/16] 0.0, 128
        %345 = vxpose.xlu0.b32.cont [8/16] 0.0, 128
        %346 = vxpose.xlu0.b32.cont [9/16] 0.0, 128
        %347 = vxpose.xlu0.b32.cont [10/16] 0.0, 128
        %348 = vxpose.xlu0.b32.cont [11/16] 0.0, 128
        %349 = vxpose.xlu0.b32.cont [12/16] 0.0, 128
        %350 = vxpose.xlu0.b32.cont [13/16] 0.0, 128
        %351 = vxpose.xlu0.b32.cont [14/16] 0.0, 128
        %352 = vxpose.xlu0.b32.cont [15/16] 0.0, 128
        %353 = vxpose.xlu0.b32.end [16/16] 0.0, 128
        %v354 = vpop.trf.xlu0
        %v355 = vpop.trf.xlu0
        %v356 = vpop.trf.xlu0
        %v357 = vpop.trf.xlu0
        %v358 = vpop.trf.xlu0
        %v359 = vpop.trf.xlu0
        %v360 = vpop.trf.xlu0
        %v361 = vpop.trf.xlu0
        %v362 = vpop.trf.xlu0
        %v363 = vpop.trf.xlu0
        %v364 = vpop.trf.xlu0
        %v365 = vpop.trf.xlu0
        %v366 = vpop.trf.xlu0
        %v367 = vpop.trf.xlu0
        %v368 = vpop.trf.xlu0
        %v369 = vpop.trf.xlu0
        %370 = vxpose.xlu0.b32.start [1/16] %v324, 128
        %371 = vxpose.xlu0.b32.cont [2/16] %v326, 128
        %372 = vxpose.xlu0.b32.cont [3/16] %v328, 128
        %373 = vxpose.xlu0.b32.cont [4/16] 0.0, 128
        %374 = vxpose.xlu0.b32.cont [5/16] 0.0, 128
        %375 = vxpose.xlu0.b32.cont [6/16] 0.0, 128
        %376 = vxpose.xlu0.b32.cont [7/16] 0.0, 128
        %377 = vxpose.xlu0.b32.cont [8/16] 0.0, 128
        %378 = vxpose.xlu0.b32.cont [9/16] 0.0, 128
        %379 = vxpose.xlu0.b32.cont [10/16] 0.0, 128
        %380 = vxpose.xlu0.b32.cont [11/16] 0.0, 128
        %381 = vxpose.xlu0.b32.cont [12/16] 0.0, 128
        %382 = vxpose.xlu0.b32.cont [13/16] 0.0, 128
        %383 = vxpose.xlu0.b32.cont [14/16] 0.0, 128
        %384 = vxpose.xlu0.b32.cont [15/16] 0.0, 128
        %385 = vxpose.xlu0.b32.end [16/16] 0.0, 128
        %v386 = vpop.trf.xlu0
        %v387 = vpop.trf.xlu0
        %v388 = vpop.trf.xlu0
        %v389 = vpop.trf.xlu0
        %v390 = vpop.trf.xlu0
        %v391 = vpop.trf.xlu0
        %v392 = vpop.trf.xlu0
        %v393 = vpop.trf.xlu0
        %v394 = vpop.trf.xlu0
        %v395 = vpop.trf.xlu0
        %v396 = vpop.trf.xlu0
        %v397 = vpop.trf.xlu0
        %v398 = vpop.trf.xlu0
        %v399 = vpop.trf.xlu0
        %v400 = vpop.trf.xlu0
        %v401 = vpop.trf.xlu0
        %vm402 = vcmask 195584
        %v404 = vsel %vm402, %v354, 0
        %v407 = vsel %vm402, %v355, 0
        %v410 = vsel %vm402, %v356, 0
        %v413 = vsel %vm402, %v357, 0
        %v416 = vsel %vm402, %v358, 0
        %v419 = vsel %vm402, %v359, 0
        %v422 = vsel %vm402, %v360, 0
        %v425 = vsel %vm402, %v361, 0
        %v428 = vsel %vm402, %v362, 0
        %v431 = vsel %vm402, %v363, 0
        %v434 = vsel %vm402, %v364, 0
        %v437 = vsel %vm402, %v365, 0
        %v440 = vsel %vm402, %v366, 0
        %v443 = vsel %vm402, %v367, 0
        %v446 = vsel %vm402, %v368, 0
        %v449 = vsel %vm402, %v369, 0
        %v452 = vsel %vm402, %v386, 0
        %v455 = vsel %vm402, %v387, 0
        %v458 = vsel %vm402, %v388, 0
        %v461 = vsel %vm402, %v389, 0
        %v464 = vsel %vm402, %v390, 0
        %v467 = vsel %vm402, %v391, 0
        %v470 = vsel %vm402, %v392, 0
        %v473 = vsel %vm402, %v393, 0
        %v476 = vsel %vm402, %v394, 0
        %v479 = vsel %vm402, %v395, 0
        %v482 = vsel %vm402, %v396, 0
        %v485 = vsel %vm402, %v397, 0
        %v488 = vsel %vm402, %v398, 0
        %v491 = vsel %vm402, %v399, 0
        %v494 = vsel %vm402, %v400, 0
        %v497 = vsel %vm402, %v401, 0
        %499 = vmatprep.subr.mxu0 %v333
        %500 = vmatpush1.msra.mxu0 %v332
        %501 = vmatprep.subr.mxu0 %v335
        %502 = vmatpush1.msra.mxu0 %v334
        %503 = vmatprep.subr.mxu0 %v337
        %504 = vmatpush1.msra.mxu0 %v336
        %505 = vmatprep.subr.mxu0 0.0
        %506 = vmatpush1.msra.mxu0 0.0
        %507 = vmatprep.subr.mxu0 0.0
        %508 = vmatpush1.msra.mxu0 0.0
        %509 = vmatprep.subr.mxu0 0.0
        %510 = vmatpush1.msra.mxu0 0.0
        %511 = vmatprep.subr.mxu0 0.0
        %512 = vmatpush1.msra.mxu0 0.0
        %513 = vmatprep.subr.mxu0 0.0
        %514 = vmatpush1.msra.mxu0 0.0
        %515 = vmatprep.subr.mxu0 0.0
        %516 = vmatpush1.msra.mxu0 0.0
        %517 = vmatprep.subr.mxu0 0.0
        %518 = vmatpush1.msra.mxu0 0.0
        %519 = vmatprep.subr.mxu0 0.0
        %520 = vmatpush1.msra.mxu0 0.0
        %521 = vmatprep.subr.mxu0 0.0
        %522 = vmatpush1.msra.mxu0 0.0
        %523 = vmatprep.subr.mxu0 0.0
        %524 = vmatpush1.msra.mxu0 0.0
        %525 = vmatprep.subr.mxu0 0.0
        %526 = vmatpush1.msra.mxu0 0.0
        %527 = vmatprep.subr.mxu0 0.0
        %528 = vmatpush1.msra.mxu0 0.0
        %529 = vmatprep.subr.mxu0 0.0
        %530 = vmatpush1.msra.mxu0 0.0
        %531 = vmatprep.subr.mxu0 0.0
        %532 = vmatpush1.msra.mxu0 0.0
        %533 = vmatprep.subr.mxu0 0.0
        %534 = vmatpush1.msra.mxu0 0.0
        %535 = vmatprep.subr.mxu0 0.0
        %536 = vmatpush1.msra.mxu0 0.0
        %537 = vmatprep.subr.mxu0 0.0
        %538 = vmatpush1.msra.mxu0 0.0
        %539 = vmatprep.subr.mxu0 0.0
        %540 = vmatpush1.msra.mxu0 0.0
        %541 = vmatprep.subr.mxu0 0.0
        %542 = vmatpush1.msra.mxu0 0.0
        %543 = vmatprep.subr.mxu0 0.0
        %544 = vmatpush1.msra.mxu0 0.0
        %545 = vmatprep.subr.mxu0 0.0
        %546 = vmatpush1.msra.mxu0 0.0
        %547 = vmatprep.subr.mxu0 0.0
        %548 = vmatpush1.msra.mxu0 0.0
        %549 = vmatprep.subr.mxu0 0.0
        %550 = vmatpush1.msra.mxu0 0.0
        %551 = vmatprep.subr.mxu0 0.0
        %552 = vmatpush1.msra.mxu0 0.0
        %553 = vmatprep.subr.mxu0 0.0
        %554 = vmatpush1.msra.mxu0 0.0
        %555 = vmatprep.subr.mxu0 0.0
        %556 = vmatpush1.msra.mxu0 0.0
        %557 = vmatprep.subr.mxu0 0.0
        %558 = vmatpush1.msra.mxu0 0.0
        %559 = vmatprep.subr.mxu0 0.0
        %560 = vmatpush1.msra.mxu0 0.0
        %561 = vmatprep.subr.mxu0 0.0
        %562 = vmatpush1.msra.mxu0 0.0
        %563 = vmatprep.mubr.f32.mxu0 0.0
        %564 = vmatmul.mubr.f32.gmra.mrb[0].mxu0 %v404
        %v565 = vpop.f32.mrb[0].mxu0
        %v566 = vadd.f32 0.0, %v565
        %v567 = vpop.f32.mrb[0].mxu0
        %v568 = vadd.f32 0.0, %v567
        %569 = vmatprep.mubr.f32.mxu0 0.0
        %570 = vmatmul.mubr.f32.gmra.mrb[0].mxu0 %v407
        %v571 = vpop.f32.mrb[0].mxu0
        %v572 = vadd.f32 0.0, %v571
        %v573 = vpop.f32.mrb[0].mxu0
        %v574 = vadd.f32 0.0, %v573
        %575 = vmatprep.mubr.f32.mxu0 0.0
        %576 = vmatmul.mubr.f32.gmra.mrb[0].mxu0 %v410
        %v577 = vpop.f32.mrb[0].mxu0
        %v578 = vadd.f32 0.0, %v577
        %v579 = vpop.f32.mrb[0].mxu0
        %v580 = vadd.f32 0.0, %v579
        %581 = vmatprep.mubr.f32.mxu0 0.0
        %582 = vmatmul.mubr.f32.gmra.mrb[0].mxu0 %v413
        %v583 = vpop.f32.mrb[0].mxu0
        %v584 = vadd.f32 0.0, %v583
        %v585 = vpop.f32.mrb[0].mxu0
        %v586 = vadd.f32 0.0, %v585
        %587 = vmatprep.mubr.f32.mxu0 0.0
        %588 = vmatmul.mubr.f32.gmra.mrb[0].mxu0 %v416
        %v589 = vpop.f32.mrb[0].mxu0
        %v590 = vadd.f32 0.0, %v589
        %v591 = vpop.f32.mrb[0].mxu0
        %v592 = vadd.f32 0.0, %v591
        %593 = vmatprep.mubr.f32.mxu0 0.0
        %594 = vmatmul.mubr.f32.gmra.mrb[0].mxu0 %v419
        %v595 = vpop.f32.mrb[0].mxu0
        %v596 = vadd.f32 0.0, %v595
        %v597 = vpop.f32.mrb[0].mxu0
        %v598 = vadd.f32 0.0, %v597
        %599 = vmatprep.mubr.f32.mxu0 0.0
        %600 = vmatmul.mubr.f32.gmra.mrb[0].mxu0 %v422
        %v601 = vpop.f32.mrb[0].mxu0
        %v602 = vadd.f32 0.0, %v601
        %v603 = vpop.f32.mrb[0].mxu0
        %v604 = vadd.f32 0.0, %v603
        %605 = vmatprep.mubr.f32.mxu0 0.0
        %606 = vmatmul.mubr.f32.gmra.mrb[0].mxu0 %v425
        %v607 = vpop.f32.mrb[0].mxu0
        %v608 = vadd.f32 0.0, %v607
        %v609 = vpop.f32.mrb[0].mxu0
        %v610 = vadd.f32 0.0, %v609
        %611 = vmatprep.mubr.f32.mxu0 0.0
        %612 = vmatmul.mubr.f32.gmra.mrb[0].mxu0 %v428
        %v613 = vpop.f32.mrb[0].mxu0
        %v614 = vadd.f32 0.0, %v613
        %v615 = vpop.f32.mrb[0].mxu0
        %v616 = vadd.f32 0.0, %v615
        %617 = vmatprep.mubr.f32.mxu0 0.0
        %618 = vmatmul.mubr.f32.gmra.mrb[0].mxu0 %v431
        %v619 = vpop.f32.mrb[0].mxu0
        %v620 = vadd.f32 0.0, %v619
        %v621 = vpop.f32.mrb[0].mxu0
        %v622 = vadd.f32 0.0, %v621
        %623 = vmatprep.mubr.f32.mxu0 0.0
        %624 = vmatmul.mubr.f32.gmra.mrb[0].mxu0 %v434
        %v625 = vpop.f32.mrb[0].mxu0
        %v626 = vadd.f32 0.0, %v625
        %v627 = vpop.f32.mrb[0].mxu0
        %v628 = vadd.f32 0.0, %v627
        %629 = vmatprep.mubr.f32.mxu0 0.0
        %630 = vmatmul.mubr.f32.gmra.mrb[0].mxu0 %v437
        %v631 = vpop.f32.mrb[0].mxu0
        %v632 = vadd.f32 0.0, %v631
        %v633 = vpop.f32.mrb[0].mxu0
        %v634 = vadd.f32 0.0, %v633
        %635 = vmatprep.mubr.f32.mxu0 0.0
        %636 = vmatmul.mubr.f32.gmra.mrb[0].mxu0 %v440
        %v637 = vpop.f32.mrb[0].mxu0
        %v638 = vadd.f32 0.0, %v637
        %v639 = vpop.f32.mrb[0].mxu0
        %v640 = vadd.f32 0.0, %v639
        %641 = vmatprep.mubr.f32.mxu0 0.0
        %642 = vmatmul.mubr.f32.gmra.mrb[0].mxu0 %v443
        %v643 = vpop.f32.mrb[0].mxu0
        %v644 = vadd.f32 0.0, %v643
        %v645 = vpop.f32.mrb[0].mxu0
        %v646 = vadd.f32 0.0, %v645
        %647 = vmatprep.mubr.f32.mxu0 0.0
        %648 = vmatmul.mubr.f32.gmra.mrb[0].mxu0 %v446
        %v649 = vpop.f32.mrb[0].mxu0
        %v650 = vadd.f32 0.0, %v649
        %v651 = vpop.f32.mrb[0].mxu0
        %v652 = vadd.f32 0.0, %v651
        %653 = vmatprep.mubr.f32.mxu0 0.0
        %654 = vmatmul.mubr.f32.gmra.mrb[0].mxu0 %v449
        %v655 = vpop.f32.mrb[0].mxu0
        %v656 = vadd.f32 0.0, %v655
        %v657 = vpop.f32.mrb[0].mxu0
        %v658 = vadd.f32 0.0, %v657
        %659 = vmatprep.mubr.f32.mxu0 0.0
        %660 = vmatmul.mubr.f32.gmra.mrb[0].mxu0 %v452
        %v661 = vpop.f32.mrb[0].mxu0
        %v662 = vadd.f32 0.0, %v661
        %v663 = vpop.f32.mrb[0].mxu0
        %v664 = vadd.f32 0.0, %v663
        %665 = vmatprep.mubr.f32.mxu0 0.0
        %666 = vmatmul.mubr.f32.gmra.mrb[0].mxu0 %v455
        %v667 = vpop.f32.mrb[0].mxu0
        %v668 = vadd.f32 0.0, %v667
        %v669 = vpop.f32.mrb[0].mxu0
        %v670 = vadd.f32 0.0, %v669
        %671 = vmatprep.mubr.f32.mxu0 0.0
        %672 = vmatmul.mubr.f32.gmra.mrb[0].mxu0 %v458
        %v673 = vpop.f32.mrb[0].mxu0
        %v674 = vadd.f32 0.0, %v673
        %v675 = vpop.f32.mrb[0].mxu0
        %v676 = vadd.f32 0.0, %v675
        %677 = vmatprep.mubr.f32.mxu0 0.0
        %678 = vmatmul.mubr.f32.gmra.mrb[0].mxu0 %v461
        %v679 = vpop.f32.mrb[0].mxu0
        %v680 = vadd.f32 0.0, %v679
        %v681 = vpop.f32.mrb[0].mxu0
        %v682 = vadd.f32 0.0, %v681
        %683 = vmatprep.mubr.f32.mxu0 0.0
        %684 = vmatmul.mubr.f32.gmra.mrb[0].mxu0 %v464
        %v685 = vpop.f32.mrb[0].mxu0
        %v686 = vadd.f32 0.0, %v685
        %v687 = vpop.f32.mrb[0].mxu0
        %v688 = vadd.f32 0.0, %v687
        %689 = vmatprep.mubr.f32.mxu0 0.0
        %690 = vmatmul.mubr.f32.gmra.mrb[0].mxu0 %v467
        %v691 = vpop.f32.mrb[0].mxu0
        %v692 = vadd.f32 0.0, %v691
        %v693 = vpop.f32.mrb[0].mxu0
        %v694 = vadd.f32 0.0, %v693
        %695 = vmatprep.mubr.f32.mxu0 0.0
        %696 = vmatmul.mubr.f32.gmra.mrb[0].mxu0 %v470
        %v697 = vpop.f32.mrb[0].mxu0
        %v698 = vadd.f32 0.0, %v697
        %v699 = vpop.f32.mrb[0].mxu0
        %v700 = vadd.f32 0.0, %v699
        %701 = vmatprep.mubr.f32.mxu0 0.0
        %702 = vmatmul.mubr.f32.gmra.mrb[0].mxu0 %v473
        %v703 = vpop.f32.mrb[0].mxu0
        %v704 = vadd.f32 0.0, %v703
        %v705 = vpop.f32.mrb[0].mxu0
        %v706 = vadd.f32 0.0, %v705
        %707 = vmatprep.mubr.f32.mxu0 0.0
        %708 = vmatmul.mubr.f32.gmra.mrb[0].mxu0 %v476
        %v709 = vpop.f32.mrb[0].mxu0
        %v710 = vadd.f32 0.0, %v709
        %v711 = vpop.f32.mrb[0].mxu0
        %v712 = vadd.f32 0.0, %v711
        %713 = vmatprep.mubr.f32.mxu0 0.0
        %714 = vmatmul.mubr.f32.gmra.mrb[0].mxu0 %v479
        %v715 = vpop.f32.mrb[0].mxu0
        %v716 = vadd.f32 0.0, %v715
        %v717 = vpop.f32.mrb[0].mxu0
        %v718 = vadd.f32 0.0, %v717
        %719 = vmatprep.mubr.f32.mxu0 0.0
        %720 = vmatmul.mubr.f32.gmra.mrb[0].mxu0 %v482
        %v721 = vpop.f32.mrb[0].mxu0
        %v722 = vadd.f32 0.0, %v721
        %v723 = vpop.f32.mrb[0].mxu0
        %v724 = vadd.f32 0.0, %v723
        %725 = vmatprep.mubr.f32.mxu0 0.0
        %726 = vmatmul.mubr.f32.gmra.mrb[0].mxu0 %v485
        %v727 = vpop.f32.mrb[0].mxu0
        %v728 = vadd.f32 0.0, %v727
        %v729 = vpop.f32.mrb[0].mxu0
        %v730 = vadd.f32 0.0, %v729
        %731 = vmatprep.mubr.f32.mxu0 0.0
        %732 = vmatmul.mubr.f32.gmra.mrb[0].mxu0 %v488
        %v733 = vpop.f32.mrb[0].mxu0
        %v734 = vadd.f32 0.0, %v733
        %v735 = vpop.f32.mrb[0].mxu0
        %v736 = vadd.f32 0.0, %v735
        %737 = vmatprep.mubr.f32.mxu0 0.0
        %738 = vmatmul.mubr.f32.gmra.mrb[0].mxu0 %v491
        %v739 = vpop.f32.mrb[0].mxu0
        %v740 = vadd.f32 0.0, %v739
        %v741 = vpop.f32.mrb[0].mxu0
        %v742 = vadd.f32 0.0, %v741
        %743 = vmatprep.mubr.f32.mxu0 0.0
        %744 = vmatmul.mubr.f32.gmra.mrb[0].mxu0 %v494
        %v745 = vpop.f32.mrb[0].mxu0
        %v746 = vadd.f32 0.0, %v745
        %v747 = vpop.f32.mrb[0].mxu0
        %v748 = vadd.f32 0.0, %v747
        %749 = vmatprep.mubr.f32.mxu0 0.0
        %750 = vmatmul.mubr.f32.gmra.mrb[0].mxu0 %v497
        %v751 = vpop.f32.mrb[0].mxu0
        %v752 = vadd.f32 0.0, %v751
        %v753 = vpop.f32.mrb[0].mxu0
        %v754 = vadd.f32 0.0, %v753
        %755 = vdwg.mxu0
        %v756 = vmul.f32 %v566, %v566
        %v757 = vmul.f32 %v568, %v568
        %v758 = vmul.f32 %v572, %v572
        %v759 = vmul.f32 %v574, %v574
        %v760 = vadd.f32 %v756, %v758
        %v761 = vadd.f32 %v757, %v759
        %v762 = vmul.f32 %v578, %v578
        %v763 = vmul.f32 %v580, %v580
        %v764 = vadd.f32 %v760, %v762
        %v765 = vadd.f32 %v761, %v763
        %v766 = vmul.f32 %v584, %v584
        %v767 = vmul.f32 %v586, %v586
        %v768 = vadd.f32 %v764, %v766
        %v769 = vadd.f32 %v765, %v767
        %v770 = vmul.f32 %v590, %v590
        %v771 = vmul.f32 %v592, %v592
        %v772 = vadd.f32 %v768, %v770
        %v773 = vadd.f32 %v769, %v771
        %v774 = vmul.f32 %v596, %v596
        %v775 = vmul.f32 %v598, %v598
        %v776 = vadd.f32 %v772, %v774
        %v777 = vadd.f32 %v773, %v775
        %v778 = vmul.f32 %v602, %v602
        %v779 = vmul.f32 %v604, %v604
        %v780 = vadd.f32 %v776, %v778
        %v781 = vadd.f32 %v777, %v779
        %v782 = vmul.f32 %v608, %v608
        %v783 = vmul.f32 %v610, %v610
        %v784 = vadd.f32 %v780, %v782
        %v785 = vadd.f32 %v781, %v783
        %v786 = vmul.f32 %v614, %v614
        %v787 = vmul.f32 %v616, %v616
        %v788 = vadd.f32 %v784, %v786
        %v789 = vadd.f32 %v785, %v787
        %v790 = vmul.f32 %v620, %v620
        %v791 = vmul.f32 %v622, %v622
        %v792 = vadd.f32 %v788, %v790
        %v793 = vadd.f32 %v789, %v791
        %v794 = vmul.f32 %v626, %v626
        %v795 = vmul.f32 %v628, %v628
        %v796 = vadd.f32 %v792, %v794
        %v797 = vadd.f32 %v793, %v795
        %v798 = vmul.f32 %v632, %v632
        %v799 = vmul.f32 %v634, %v634
        %v800 = vadd.f32 %v796, %v798
        %v801 = vadd.f32 %v797, %v799
        %v802 = vmul.f32 %v638, %v638
        %v803 = vmul.f32 %v640, %v640
        %v804 = vadd.f32 %v800, %v802
        %v805 = vadd.f32 %v801, %v803
        %v806 = vmul.f32 %v644, %v644
        %v807 = vmul.f32 %v646, %v646
        %v808 = vadd.f32 %v804, %v806
        %v809 = vadd.f32 %v805, %v807
        %v810 = vmul.f32 %v650, %v650
        %v811 = vmul.f32 %v652, %v652
        %v812 = vadd.f32 %v808, %v810
        %v813 = vadd.f32 %v809, %v811
        %v814 = vmul.f32 %v656, %v656
        %v815 = vmul.f32 %v658, %v658
        %v816 = vadd.f32 %v812, %v814
        %v817 = vadd.f32 %v813, %v815
        %v818 = vmul.f32 %v662, %v662
        %v819 = vmul.f32 %v664, %v664
        %v820 = vadd.f32 %v816, %v818
        %v821 = vadd.f32 %v817, %v819
        %v822 = vmul.f32 %v668, %v668
        %v823 = vmul.f32 %v670, %v670
        %v824 = vadd.f32 %v820, %v822
        %v825 = vadd.f32 %v821, %v823
        %v826 = vmul.f32 %v674, %v674
        %v827 = vmul.f32 %v676, %v676
        %v828 = vadd.f32 %v824, %v826
        %v829 = vadd.f32 %v825, %v827
        %v830 = vmul.f32 %v680, %v680
        %v831 = vmul.f32 %v682, %v682
        %v832 = vadd.f32 %v828, %v830
        %v833 = vadd.f32 %v829, %v831
        %v834 = vmul.f32 %v686, %v686
        %v835 = vmul.f32 %v688, %v688
        %v836 = vadd.f32 %v832, %v834
        %v837 = vadd.f32 %v833, %v835
        %v838 = vmul.f32 %v692, %v692
        %v839 = vmul.f32 %v694, %v694
        %v840 = vadd.f32 %v836, %v838
        %v841 = vadd.f32 %v837, %v839
        %v842 = vmul.f32 %v698, %v698
        %v843 = vmul.f32 %v700, %v700
        %v844 = vadd.f32 %v840, %v842
        %v845 = vadd.f32 %v841, %v843
        %v846 = vmul.f32 %v704, %v704
        %v847 = vmul.f32 %v706, %v706
        %v848 = vadd.f32 %v844, %v846
        %v849 = vadd.f32 %v845, %v847
        %v850 = vmul.f32 %v710, %v710
        %v851 = vmul.f32 %v712, %v712
        %v852 = vadd.f32 %v848, %v850
        %v853 = vadd.f32 %v849, %v851
        %v854 = vmul.f32 %v716, %v716
        %v855 = vmul.f32 %v718, %v718
        %v856 = vadd.f32 %v852, %v854
        %v857 = vadd.f32 %v853, %v855
        %v858 = vmul.f32 %v722, %v722
        %v859 = vmul.f32 %v724, %v724
        %v860 = vadd.f32 %v856, %v858
        %v861 = vadd.f32 %v857, %v859
        %v862 = vmul.f32 %v728, %v728
        %v863 = vmul.f32 %v730, %v730
        %v864 = vadd.f32 %v860, %v862
        %v865 = vadd.f32 %v861, %v863
        %v866 = vmul.f32 %v734, %v734
        %v867 = vmul.f32 %v736, %v736
        %v868 = vadd.f32 %v864, %v866
        %v869 = vadd.f32 %v865, %v867
        %v870 = vmul.f32 %v740, %v740
        %v871 = vmul.f32 %v742, %v742
        %v872 = vadd.f32 %v868, %v870
        %v873 = vadd.f32 %v869, %v871
        %v874 = vmul.f32 %v746, %v746
        %v875 = vmul.f32 %v748, %v748
        %v876 = vadd.f32 %v872, %v874
        %v877 = vadd.f32 %v873, %v875
        %v878 = vmul.f32 %v752, %v752
        %v879 = vmul.f32 %v754, %v754
        %v880 = vadd.f32 %v876, %v878
        %v881 = vadd.f32 %v877, %v879
        %v882 = vadd.f32 %v880, %v881
        %v883 = vld [vmem:[%s176] sm:$0xff]
        %v884 = vstv %s319
        %v885 = vmul.f32 %v884, %v882
        %v886 = vadd.f32 %v883, %v885
        %887 = vst [vmem:[%s176] sm:$0xff] %v886
        %s888 = sand.u32 %s95, 1
        %s889 = scalar_lea.sflag [#allocation10], %s888
        %s890 = sand.u32 %s95, 1
        %s891 = smul.addr %s890, 8
        %s892 = scalar_lea.vmem [#allocation13], %s891
        // Predicated region
        $region41: #{tpu_custom_call.1} parent=27 // pred_check
          %p893 = pneg %p105
        $region42: #{tpu_custom_call.1} parent=27 // pred_check_branch
          %895 = sbr.rel (%p893) target = $region44
        $region43: #{tpu_custom_call.1} parent=27 // pred_region
          %s897 = ssub.s32 128, 128
          %898 = vsyncadd %s889, %s897
          %s899 = smul.addr %s37, 128
          %s900 = scalar_lea.hbm %s5, %s899
          %s902 = sshll.u32 %s892, 4
          %s903 = int_to_ptr.vmem [resolvable:$true] %s902
          %905 = dma.vmem_to_hbm [thread:$0]  %s903, 128, %s900, %s889
        $region44: #{tpu_custom_call.1} parent=27 // pred_fallthru
          _
      $region28: #{tpu_custom_call.1} parent=5 // pred_fallthru
        _
      %p906 = scmp.le.s32.totalorder 2, %s28
      // Predicated region
      $region45: #{tpu_custom_call.1} parent=5 // pred_check
        %p907 = pneg %p906
      $region46: #{tpu_custom_call.1} parent=5 // pred_check_branch
        %909 = sbr.rel (%p907) target = $region48
      $region47: #{tpu_custom_call.1} parent=5 // pred_region
        %s910 = ssub.s32 %s28, 2
        // Predicated region
        $region49: #{tpu_custom_call.1} parent=47 // pred_check
          %p911 = pneg %p111
        $region50: #{tpu_custom_call.1} parent=47 // pred_check_branch
          %913 = sbr.rel (%p911) target = $region52
        $region51: #{tpu_custom_call.1} parent=47 // pred_region
          %s914 = sand.u32 %s96, 1
          %s915 = scalar_lea.sflag [#allocation10], %s914
          %s916 = sand.u32 %s96, 1
          %s917 = smul.addr %s916, 8
          %s918 = scalar_lea.vmem [#allocation13], %s917
          %919 = dma.done %s915, 128
        $region52: #{tpu_custom_call.1} parent=47 // pred_fallthru
          _
      $region48: #{tpu_custom_call.1} parent=5 // pred_fallthru
        _
    $region6: #{tpu_custom_call.1} parent=1 // loop_footer
      %s32 = sadd.s32 1, %s28
    $region7: #{tpu_custom_call.1} parent=1 // loop_footer_branch
      %27 = sbr.rel target = $region3
    $region8: #{tpu_custom_call.1} parent=1 // loop_exit
      _
    %920 = vsyncpa [#allocation9], 1
    %s921 = scalar_lea.sflag [#allocation9], 1
    %922 = vsyncpa %s921, 1
    %923 = vsyncpa [#allocation12], 1
    %924 = vsyncpa [#allocation10], 1
    %s925 = scalar_lea.sflag [#allocation10], 1
    %926 = vsyncpa %s925, 1

</llo_original>
